<compile_context>
chip_gen: v6e
topology: v6e:2x2x1
jax: 0.10.0
libtpu: 0.0.40
codegen_flags: <defaults>
</compile_context>

<pallas_src>
import jax
import jax.numpy as jnp
from jax.experimental import pallas as pl
from jax.experimental.pallas import tpu as pltpu


# ----------------------------------------------------------------------------
# Kernel: whole decoder, fused
# ----------------------------------------------------------------------------
def decoder_kernel(x_ref, adj_ref,
                   w1m_ref, b1m_ref,
                   w2m_ref, b2m_ref, w2v_ref, b2v_ref,
                   noise_ref, out_ref):
    adj = adj_ref[...]                      # [Np, Np] bf16 (exact 0/1 counts)
    x = x_ref[...]                          # [Np, Hp] f32

    # -------------------- gc1: RobustGCNConv(nhid, nhid), initial=True -----
    m = jnp.dot(x, w1m_ref[...], preferred_element_type=jnp.float32) + b1m_ref[...]
    v = m                                   # var = mean * 1 (pre-activation)
    m = jnp.maximum(m, 0.0)                 # act0 = ReLU
    v = jnp.maximum(v, 0.0)                 # act1 = ReLU
    att = jnp.exp(-v)                       # attention = exp(-var)
    m = m * att
    v = v * att * att

    # fused aggregation: adj @ [mean | var]   (shared LHS, one MXU pass)
    h = m.shape[1]
    mv = jnp.concatenate([m, v], axis=-1).astype(adj.dtype)    # [Np, 2*Hp] bf16
    agg = jnp.dot(adj, mv, preferred_element_type=jnp.float32)
    m = agg[:, :h]
    v = agg[:, h:]

    # dropout branch taken (p=0.5 > 0): activations, dropout = identity (eval)
    # TODO(synk): training-mode dropout (random mask + 1/(1-p) scale) not implemented.
    m = jnp.maximum(m, 0.0)
    v = jnp.maximum(v, 0.0)

    # -------------------- gc2: RobustGCNConv(nhid, nfeat), initial=False ---
    m2 = jnp.dot(m, w2m_ref[...], preferred_element_type=jnp.float32) + b2m_ref[...]
    v2 = jnp.dot(v, w2v_ref[...], preferred_element_type=jnp.float32) + b2v_ref[...]
    m2 = jnp.maximum(m2, 0.0)
    v2 = jnp.maximum(v2, 0.0)
    att2 = jnp.exp(-v2)
    m2 = m2 * att2
    v2 = v2 * att2 * att2

    f = m2.shape[1]
    mv2 = jnp.concatenate([m2, v2], axis=-1).astype(adj.dtype)  # [Np, 2*Fp] bf16
    agg2 = jnp.dot(adj, mv2, preferred_element_type=jnp.float32)
    m2 = agg2[:, :f]
    v2 = agg2[:, f:]

    m2 = jnp.maximum(m2, 0.0)
    v2 = jnp.maximum(v2, 0.0)

    # -------------------- output = mean + noise * var**0.5 -----------------
    out_ref[...] = m2 + noise_ref[...] * jnp.sqrt(v2)


# ----------------------------------------------------------------------------
# Wrapper
# ----------------------------------------------------------------------------
_VMEM_SPEC = pl.BlockSpec(memory_space=pltpu.MemorySpace.VMEM)


def _round_up(x: int, m: int) -> int:
    return (x + m - 1) // m * m


def init_params(key, nfeat: int, nhid: int):
    """Deterministic parameter init (Linear weights stored as [in, out])."""
    ks = jax.random.split(key, 8)

    def lin(kw, kb, fin, fout):
        w = jax.random.uniform(kw, (fin, fout), jnp.float32,
                               -1.0 / jnp.sqrt(fin), 1.0 / jnp.sqrt(fin))
        b = jax.random.uniform(kb, (1, fout), jnp.float32,
                               -1.0 / jnp.sqrt(fin), 1.0 / jnp.sqrt(fin))
        return w, b

    # gc1: RobustGCNConv(nhid, nhid), gc2: RobustGCNConv(nhid, nfeat)
    gc1_wm, gc1_bm = lin(ks[0], ks[1], nhid, nhid)
    gc1_wv, gc1_bv = lin(ks[2], ks[3], nhid, nhid)   # allocated for module parity; unused (initial=True)
    gc2_wm, gc2_bm = lin(ks[4], ks[5], nhid, nfeat)
    gc2_wv, gc2_bv = lin(ks[6], ks[7], nhid, nfeat)
    return {
        "gc1": (gc1_wm, gc1_bm, gc1_wv, gc1_bv),
        "gc2": (gc2_wm, gc2_bm, gc2_wv, gc2_bv),
    }


def attribute_decoder_forward(x, edge_index, params, noise_key):
    """x: [N, nhid] f32, edge_index: [2, E] int32 -> [N, nfeat] f32."""
    n, nhid = x.shape
    nfeat = params["gc2"][0].shape[1]

    n_p = _round_up(n, 8)        # sublane multiple
    h_p = _round_up(nhid, 128)   # lane-dense hidden dim
    f_p = _round_up(nfeat, 128)  # lane-dense output dim

    # to_dense_adj(edge_index)[0]  (glue, plain JAX), stored bf16 (exact counts)
    adj = jnp.zeros((n_p, n_p), jnp.float32).at[
        edge_index[0], edge_index[1]].add(1.0).astype(jnp.bfloat16)

    # zero-pad activations / weights to lane width (padding provably inert:
    # zero rows/cols never contaminate real rows/cols; stripped at the end)
    x_p = jnp.zeros((n_p, h_p), jnp.float32).at[:n, :nhid].set(x)

    def pad_w(w, fin, fout):
        return jnp.zeros((fin, fout), jnp.float32).at[:w.shape[0], :w.shape[1]].set(w)

    def pad_b(b, fout):
        return jnp.zeros((1, fout), jnp.float32).at[:, :b.shape[1]].set(b)

    w1m, b1m, _, _ = params["gc1"]            # gc1 var_conv never DMA'd (initial=True)
    w2m, b2m, w2v, b2v = params["gc2"]

    w1m_p, b1m_p = pad_w(w1m, h_p, h_p), pad_b(b1m, h_p)
    w2m_p, b2m_p = pad_w(w2m, h_p, f_p), pad_b(b2m, f_p)
    w2v_p, b2v_p = pad_w(w2v, h_p, f_p), pad_b(b2v, f_p)

    # sample = randn(var.shape)  (drawn in the wrapper, padded shape)
    noise = jax.random.normal(noise_key, (n_p, f_p), jnp.float32)

    # Advisory cost estimate (matmul flops dominate).
    flops = int(2 * n_p * h_p * h_p          # gc1 mean linear
                + 2 * n_p * n_p * 2 * h_p    # gc1 fused aggregation
                + 2 * 2 * n_p * h_p * f_p    # gc2 mean + var linears
                + 2 * n_p * n_p * 2 * f_p)   # gc2 fused aggregation
    transcendentals = int(n_p * (h_p + 2 * f_p))           # exp, exp, sqrt
    bytes_accessed = int(4 * (x_p.size + w1m_p.size + b1m_p.size
                              + w2m_p.size + b2m_p.size
                              + w2v_p.size + b2v_p.size
                              + noise.size + n_p * f_p)
                         + 2 * adj.size)

    out_p = pl.pallas_call(
        decoder_kernel,
        out_shape=jax.ShapeDtypeStruct((n_p, f_p), jnp.float32),
        in_specs=[_VMEM_SPEC] * 9,
        out_specs=_VMEM_SPEC,
        cost_estimate=pl.CostEstimate(flops=flops,
                                      transcendentals=transcendentals,
                                      bytes_accessed=bytes_accessed),
    )(x_p, adj, w1m_p, b1m_p, w2m_p, b2m_p, w2v_p, b2v_p, noise)

    return out_p[:n, :nfeat]


# ----------------------------------------------------------------------------
# Main
# ----------------------------------------------------------------------------
if __name__ == "__main__":
    key = jax.random.PRNGKey(0)
    k_x, k_e, k_p, k_n = jax.random.split(key, 4)

    N = 8        # num nodes
    NHID = 32    # hidden dim (decoder input features)
    NFEAT = 16   # reconstructed attribute dim
    E = 16       # num edges

    x = jax.random.normal(k_x, (N, NHID), jnp.float32)
    edge_index = jax.random.randint(k_e, (2, E), 0, N, jnp.int32)
    params = init_params(k_p, NFEAT, NHID)

    out = attribute_decoder_forward(x, edge_index, params, k_n)
    out = jax.block_until_ready(out)

    assert out.shape == (N, NFEAT), out.shape
    assert out.dtype == jnp.float32
    assert bool(jnp.all(jnp.isfinite(out)))
    print("KERNEL_OK")
</pallas_src>

<mosaic_0001>
module attributes {stable_mosaic.version = 11 : i64} {
  func.func @decoder_kernel(%arg0: memref<8x128xf32, #tpu.memory_space<vmem>>, %arg1: memref<8x8xbf16, #tpu.memory_space<vmem>>, %arg2: memref<128x128xf32, #tpu.memory_space<vmem>>, %arg3: memref<1x128xf32, #tpu.memory_space<vmem>>, %arg4: memref<128x128xf32, #tpu.memory_space<vmem>>, %arg5: memref<1x128xf32, #tpu.memory_space<vmem>>, %arg6: memref<128x128xf32, #tpu.memory_space<vmem>>, %arg7: memref<1x128xf32, #tpu.memory_space<vmem>>, %arg8: memref<8x128xf32, #tpu.memory_space<vmem>>, %arg9: memref<8x128xf32, #tpu.memory_space<vmem>>) attributes {dimension_semantics = [], scalar_prefetch = 0 : i64, scratch_operands = 0 : i64, tpu.core_type = #tpu.core_type<tc>} {
    %c0 = arith.constant 0 : index
    %c0_0 = arith.constant 0 : index
    %0 = vector.load %arg1[%c0, %c0_0] : memref<8x8xbf16, #tpu.memory_space<vmem>>, vector<8x8xbf16>
    %c0_1 = arith.constant 0 : index
    %c0_2 = arith.constant 0 : index
    %1 = vector.load %arg0[%c0_1, %c0_2] : memref<8x128xf32, #tpu.memory_space<vmem>>, vector<8x128xf32>
    %c0_3 = arith.constant 0 : index
    %c0_4 = arith.constant 0 : index
    %2 = vector.load %arg2[%c0_3, %c0_4] : memref<128x128xf32, #tpu.memory_space<vmem>>, vector<128x128xf32>
    %cst = arith.constant dense<0.000000e+00> : vector<8x128xf32>
    %3 = tpu.matmul %1, %2, %cst {dimension_numbers = #tpu.dot_dimension_numbers<[1], [0], [0], [1], [0, 0, 1, 1], [], []>} : vector<8x128xf32>, vector<128x128xf32>, vector<8x128xf32> -> vector<8x128xf32>
    %c0_5 = arith.constant 0 : index
    %c0_6 = arith.constant 0 : index
    %4 = vector.load %arg3[%c0_5, %c0_6] : memref<1x128xf32, #tpu.memory_space<vmem>>, vector<1x128xf32>
    %5 = vector.broadcast %4 : vector<1x128xf32> to vector<8x128xf32>
    %6 = arith.addf %3, %5 : vector<8x128xf32>
    %cst_7 = arith.constant 0.000000e+00 : f32
    %7 = vector.broadcast %cst_7 : f32 to vector<8x128xf32>
    %8 = arith.maximumf %6, %7 : vector<8x128xf32>
    %cst_8 = arith.constant 0.000000e+00 : f32
    %9 = vector.broadcast %cst_8 : f32 to vector<8x128xf32>
    %10 = arith.maximumf %6, %9 : vector<8x128xf32>
    %cst_9 = arith.constant 0.000000e+00 : f32
    %11 = vector.broadcast %cst_9 : f32 to vector<8x128xf32>
    %12 = arith.subf %11, %10 : vector<8x128xf32>
    %13 = math.exp %12 : vector<8x128xf32>
    %14 = arith.mulf %8, %13 : vector<8x128xf32>
    %15 = arith.mulf %10, %13 : vector<8x128xf32>
    %16 = arith.mulf %15, %13 : vector<8x128xf32>
    %17 = tpu.concatenate %14, %16 in 1 : vector<8x128xf32>, vector<8x128xf32> -> vector<8x256xf32>
    %18 = arith.truncf %17 : vector<8x256xf32> to vector<8x256xbf16>
    %cst_10 = arith.constant dense<0.000000e+00> : vector<8x256xf32>
    %19 = tpu.matmul %0, %18, %cst_10 {dimension_numbers = #tpu.dot_dimension_numbers<[1], [0], [0], [1], [0, 0, 1, 1], [], []>} : vector<8x8xbf16>, vector<8x256xbf16>, vector<8x256xf32> -> vector<8x256xf32>
    %20 = vector.extract_strided_slice %19 {offsets = [0, 0], sizes = [8, 128], strides = [1, 1]} : vector<8x256xf32> to vector<8x128xf32>
    %21 = vector.extract_strided_slice %19 {offsets = [0, 128], sizes = [8, 128], strides = [1, 1]} : vector<8x256xf32> to vector<8x128xf32>
    %cst_11 = arith.constant 0.000000e+00 : f32
    %22 = vector.broadcast %cst_11 : f32 to vector<8x128xf32>
    %23 = arith.maximumf %20, %22 : vector<8x128xf32>
    %cst_12 = arith.constant 0.000000e+00 : f32
    %24 = vector.broadcast %cst_12 : f32 to vector<8x128xf32>
    %25 = arith.maximumf %21, %24 : vector<8x128xf32>
    %c0_13 = arith.constant 0 : index
    %c0_14 = arith.constant 0 : index
    %26 = vector.load %arg4[%c0_13, %c0_14] : memref<128x128xf32, #tpu.memory_space<vmem>>, vector<128x128xf32>
    %cst_15 = arith.constant dense<0.000000e+00> : vector<8x128xf32>
    %27 = tpu.matmul %23, %26, %cst_15 {dimension_numbers = #tpu.dot_dimension_numbers<[1], [0], [0], [1], [0, 0, 1, 1], [], []>} : vector<8x128xf32>, vector<128x128xf32>, vector<8x128xf32> -> vector<8x128xf32>
    %c0_16 = arith.constant 0 : index
    %c0_17 = arith.constant 0 : index
    %28 = vector.load %arg5[%c0_16, %c0_17] : memref<1x128xf32, #tpu.memory_space<vmem>>, vector<1x128xf32>
    %29 = vector.broadcast %28 : vector<1x128xf32> to vector<8x128xf32>
    %30 = arith.addf %27, %29 : vector<8x128xf32>
    %c0_18 = arith.constant 0 : index
    %c0_19 = arith.constant 0 : index
    %31 = vector.load %arg6[%c0_18, %c0_19] : memref<128x128xf32, #tpu.memory_space<vmem>>, vector<128x128xf32>
    %cst_20 = arith.constant dense<0.000000e+00> : vector<8x128xf32>
    %32 = tpu.matmul %25, %31, %cst_20 {dimension_numbers = #tpu.dot_dimension_numbers<[1], [0], [0], [1], [0, 0, 1, 1], [], []>} : vector<8x128xf32>, vector<128x128xf32>, vector<8x128xf32> -> vector<8x128xf32>
    %c0_21 = arith.constant 0 : index
    %c0_22 = arith.constant 0 : index
    %33 = vector.load %arg7[%c0_21, %c0_22] : memref<1x128xf32, #tpu.memory_space<vmem>>, vector<1x128xf32>
    %34 = vector.broadcast %33 : vector<1x128xf32> to vector<8x128xf32>
    %35 = arith.addf %32, %34 : vector<8x128xf32>
    %cst_23 = arith.constant 0.000000e+00 : f32
    %36 = vector.broadcast %cst_23 : f32 to vector<8x128xf32>
    %37 = arith.maximumf %30, %36 : vector<8x128xf32>
    %cst_24 = arith.constant 0.000000e+00 : f32
    %38 = vector.broadcast %cst_24 : f32 to vector<8x128xf32>
    %39 = arith.maximumf %35, %38 : vector<8x128xf32>
    %cst_25 = arith.constant 0.000000e+00 : f32
    %40 = vector.broadcast %cst_25 : f32 to vector<8x128xf32>
    %41 = arith.subf %40, %39 : vector<8x128xf32>
    %42 = math.exp %41 : vector<8x128xf32>
    %43 = arith.mulf %37, %42 : vector<8x128xf32>
    %44 = arith.mulf %39, %42 : vector<8x128xf32>
    %45 = arith.mulf %44, %42 : vector<8x128xf32>
    %46 = tpu.concatenate %43, %45 in 1 : vector<8x128xf32>, vector<8x128xf32> -> vector<8x256xf32>
    %47 = arith.truncf %46 : vector<8x256xf32> to vector<8x256xbf16>
    %cst_26 = arith.constant dense<0.000000e+00> : vector<8x256xf32>
    %48 = tpu.matmul %0, %47, %cst_26 {dimension_numbers = #tpu.dot_dimension_numbers<[1], [0], [0], [1], [0, 0, 1, 1], [], []>} : vector<8x8xbf16>, vector<8x256xbf16>, vector<8x256xf32> -> vector<8x256xf32>
    %49 = vector.extract_strided_slice %48 {offsets = [0, 0], sizes = [8, 128], strides = [1, 1]} : vector<8x256xf32> to vector<8x128xf32>
    %50 = vector.extract_strided_slice %48 {offsets = [0, 128], sizes = [8, 128], strides = [1, 1]} : vector<8x256xf32> to vector<8x128xf32>
    %cst_27 = arith.constant 0.000000e+00 : f32
    %51 = vector.broadcast %cst_27 : f32 to vector<8x128xf32>
    %52 = arith.maximumf %49, %51 : vector<8x128xf32>
    %cst_28 = arith.constant 0.000000e+00 : f32
    %53 = vector.broadcast %cst_28 : f32 to vector<8x128xf32>
    %54 = arith.maximumf %50, %53 : vector<8x128xf32>
    %c0_29 = arith.constant 0 : index
    %c0_30 = arith.constant 0 : index
    %55 = vector.load %arg8[%c0_29, %c0_30] : memref<8x128xf32, #tpu.memory_space<vmem>>, vector<8x128xf32>
    %56 = math.sqrt %54 : vector<8x128xf32>
    %57 = arith.mulf %55, %56 : vector<8x128xf32>
    %58 = arith.addf %52, %57 : vector<8x128xf32>
    %c0_31 = arith.constant 0 : index
    %c0_32 = arith.constant 0 : index
    %59 = vector.load %arg9[%c0_31, %c0_32] : memref<8x128xf32, #tpu.memory_space<vmem>>, vector<8x128xf32>
    tpu.vector_store %arg9[%c0_31, %c0_32], %58 {strides = array<i32>} : memref<8x128xf32, #tpu.memory_space<vmem>>, vector<8x128xf32>,
    return
  }
}

</mosaic_0001>

<llo_original>
// kernel: tpu_custom_call.1
$region0: #{tpu_custom_call.1}
  #allocation0 [shape = 'u32[]', space=smem, size = 0x4, offset = 0x4, fixed_abs, tag = 'smem constant byte address 0x4 - core index']
  #allocation1 [shape = 'u32[144,128]{1,0:T(1,128)}', space=vmem, size = 0x12000, scoped, tag = 'internal scratch']
  %s0 = inlined_call_operand.hbm [shape: f32[8,128], index: 0, kind: input, shape index: {}]
  %s1 = inlined_call_operand.hbm [shape: bf16[8,8], index: 1, kind: input, shape index: {}]
  %s2 = inlined_call_operand.hbm [shape: f32[128,128], index: 2, kind: input, shape index: {}]
  %s3 = inlined_call_operand.vmem [shape: f32[1,128], index: 3, kind: input, shape index: {}]
  %s4 = inlined_call_operand.hbm [shape: f32[128,128], index: 4, kind: input, shape index: {}]
  %s5 = inlined_call_operand.vmem [shape: f32[1,128], index: 5, kind: input, shape index: {}]
  %s6 = inlined_call_operand.hbm [shape: f32[128,128], index: 6, kind: input, shape index: {}]
  %s7 = inlined_call_operand.vmem [shape: f32[1,128], index: 7, kind: input, shape index: {}]
  %s8 = inlined_call_operand.vmem [shape: f32[8,128], index: 8, kind: input, shape index: {}]
  %s9 = inlined_call_operand.hbm [shape: f32[8,128], index: 9, kind: output, shape index: {}]
  %s10 = sld [smem:[#allocation0]]
  $region66: #{tpu_custom_call.1} parent=0
    _
  %s12 = ssub.s32 1, %s10
  %s13 = scalar_select 0, %s12, %s10
  $region1: #{tpu_custom_call.1} parent=0
    #allocation2 [shape = 'u8[4096]{0}', space=vmem, size = 0x1000, scoped, tag = 'input window, operand 0, single buffered']
    #allocation3 [shape = 's32[1]{0}', space=sflag, size = 0x4, scoped, tag = 'scoped memory for tpu_custom_call.1']
    #allocation4 [shape = 's32[1]{0}', space=sflag, size = 0x4, scoped, tag = 'scoped memory for tpu_custom_call.1']
    #allocation5 [shape = 'u8[2048]{0}', space=vmem, size = 0x800, scoped, tag = 'input window, operand 1, single buffered']
    #allocation6 [shape = 's32[1]{0}', space=sflag, size = 0x4, scoped, tag = 'scoped memory for tpu_custom_call.1']
    #allocation7 [shape = 'u8[65536]{0}', space=vmem, size = 0x10000, scoped, tag = 'input window, operand 2, single buffered']
    #allocation8 [shape = 'u8[65536]{0}', space=vmem, size = 0x10000, scoped, tag = 'input window, operand 4, single buffered']
    #allocation9 [shape = 's32[1]{0}', space=sflag, size = 0x4, scoped, tag = 'scoped memory for tpu_custom_call.1']
    #allocation10 [shape = 'u8[65536]{0}', space=vmem, size = 0x10000, scoped, tag = 'input window, operand 6, single buffered']
    #allocation11 [shape = 'u8[4096]{0}', space=vmem, size = 0x1000, scoped, tag = 'output window, operand 0, single buffered']
    %14 = vsyncpa [#allocation3], 0
    %15 = vsyncpa [#allocation6], 0
    %16 = vsyncpa [#allocation9], 0
    %17 = vsyncpa [#allocation4], 0
    // Predicated region
    $region2: #{tpu_custom_call.1} parent=1 // pred_check
      _
    $region3: #{tpu_custom_call.1} parent=1 // pred_check_branch
      %19 = sbr.rel (0) target = $region5
    $region4: #{tpu_custom_call.1} parent=1 // pred_region
      %s21 = ssub.s32 128, 128
      %22 = vsyncadd [#allocation3], %s21
      %s24 = sshll.u32 [#allocation2], 4
      %s25 = int_to_ptr.vmem [resolvable:$true] %s24
      %27 = dma.hbm_to_vmem [thread:$0]  %s0, 128, %s25, [#allocation3]
    $region5: #{tpu_custom_call.1} parent=1 // pred_fallthru
      _
    // Predicated region
    $region6: #{tpu_custom_call.1} parent=1 // pred_check
      _
    $region7: #{tpu_custom_call.1} parent=1 // pred_check_branch
      %29 = sbr.rel (0) target = $region9
    $region8: #{tpu_custom_call.1} parent=1 // pred_region
      %s31 = ssub.s32 64, 64
      %32 = vsyncadd [#allocation6], %s31
      %s34 = sshll.u32 [#allocation5], 4
      %s35 = int_to_ptr.vmem [resolvable:$true] %s34
      %37 = dma.hbm_to_vmem [thread:$0]  %s1, 64, %s35, [#allocation6]
    $region9: #{tpu_custom_call.1} parent=1 // pred_fallthru
      _
    // Predicated region
    $region10: #{tpu_custom_call.1} parent=1 // pred_check
      _
    $region11: #{tpu_custom_call.1} parent=1 // pred_check_branch
      %39 = sbr.rel (0) target = $region13
    $region12: #{tpu_custom_call.1} parent=1 // pred_region
      %s41 = ssub.s32 2048, 2048
      %42 = vsyncadd [#allocation6], %s41
      %s43 = sshll.u32 [#allocation7], 4
      %s44 = int_to_ptr.vmem [resolvable:$true] %s43
      %49 = dma.hbm_to_vmem [thread:$0]  %s2, 2048, %s44, [#allocation6], 128, 128, 8
    $region13: #{tpu_custom_call.1} parent=1 // pred_fallthru
      _
    // Predicated region
    $region14: #{tpu_custom_call.1} parent=1 // pred_check
      _
    $region15: #{tpu_custom_call.1} parent=1 // pred_check_branch
      %51 = sbr.rel (0) target = $region17
    $region16: #{tpu_custom_call.1} parent=1 // pred_region
      _
    $region17: #{tpu_custom_call.1} parent=1 // pred_fallthru
      _
    // Predicated region
    $region18: #{tpu_custom_call.1} parent=1 // pred_check
      _
    $region19: #{tpu_custom_call.1} parent=1 // pred_check_branch
      %53 = sbr.rel (0) target = $region21
    $region20: #{tpu_custom_call.1} parent=1 // pred_region
      %s55 = ssub.s32 2048, 2048
      %56 = vsyncadd [#allocation9], %s55
      %s57 = sshll.u32 [#allocation8], 4
      %s58 = int_to_ptr.vmem [resolvable:$true] %s57
      %63 = dma.hbm_to_vmem [thread:$0]  %s4, 2048, %s58, [#allocation9], 128, 128, 8
    $region21: #{tpu_custom_call.1} parent=1 // pred_fallthru
      _
    // Predicated region
    $region22: #{tpu_custom_call.1} parent=1 // pred_check
      _
    $region23: #{tpu_custom_call.1} parent=1 // pred_check_branch
      %65 = sbr.rel (0) target = $region25
    $region24: #{tpu_custom_call.1} parent=1 // pred_region
      _
    $region25: #{tpu_custom_call.1} parent=1 // pred_fallthru
      _
    // Predicated region
    $region26: #{tpu_custom_call.1} parent=1 // pred_check
      _
    $region27: #{tpu_custom_call.1} parent=1 // pred_check_branch
      %67 = sbr.rel (0) target = $region29
    $region28: #{tpu_custom_call.1} parent=1 // pred_region
      %s69 = ssub.s32 2048, 2048
      %70 = vsyncadd [#allocation9], %s69
      %s71 = sshll.u32 [#allocation10], 4
      %s72 = int_to_ptr.vmem [resolvable:$true] %s71
      %77 = dma.hbm_to_vmem [thread:$0]  %s6, 2048, %s72, [#allocation9], 128, 128, 8
    $region29: #{tpu_custom_call.1} parent=1 // pred_fallthru
      _
    // Predicated region
    $region30: #{tpu_custom_call.1} parent=1 // pred_check
      _
    $region31: #{tpu_custom_call.1} parent=1 // pred_check_branch
      %79 = sbr.rel (0) target = $region33
    $region32: #{tpu_custom_call.1} parent=1 // pred_region
      _
    $region33: #{tpu_custom_call.1} parent=1 // pred_fallthru
      _
    // Predicated region
    $region34: #{tpu_custom_call.1} parent=1 // pred_check
      _
    $region35: #{tpu_custom_call.1} parent=1 // pred_check_branch
      %81 = sbr.rel (0) target = $region37
    $region36: #{tpu_custom_call.1} parent=1 // pred_region
      _
    $region37: #{tpu_custom_call.1} parent=1 // pred_fallthru
      _
    // Predicated region
    $region38: #{tpu_custom_call.1} parent=1 // pred_check
      _
    $region39: #{tpu_custom_call.1} parent=1 // pred_check_branch
      %83 = sbr.rel (0) target = $region41
    $region40: #{tpu_custom_call.1} parent=1 // pred_region
      %84 = dma.done [#allocation3], 128
    $region41: #{tpu_custom_call.1} parent=1 // pred_fallthru
      _
    // Predicated region
    $region42: #{tpu_custom_call.1} parent=1 // pred_check
      _
    $region43: #{tpu_custom_call.1} parent=1 // pred_check_branch
      %86 = sbr.rel (0) target = $region45
    $region44: #{tpu_custom_call.1} parent=1 // pred_region
      %87 = dma.done [#allocation6], 64
    $region45: #{tpu_custom_call.1} parent=1 // pred_fallthru
      _
    // Predicated region
    $region46: #{tpu_custom_call.1} parent=1 // pred_check
      _
    $region47: #{tpu_custom_call.1} parent=1 // pred_check_branch
      %89 = sbr.rel (0) target = $region49
    $region48: #{tpu_custom_call.1} parent=1 // pred_region
      %90 = dma.done [#allocation6], 2048
    $region49: #{tpu_custom_call.1} parent=1 // pred_fallthru
      _
    // Predicated region
    $region50: #{tpu_custom_call.1} parent=1 // pred_check
      _
    $region51: #{tpu_custom_call.1} parent=1 // pred_check_branch
      %92 = sbr.rel (0) target = $region53
    $region52: #{tpu_custom_call.1} parent=1 // pred_region
      %93 = dma.done [#allocation9], 2048
    $region53: #{tpu_custom_call.1} parent=1 // pred_fallthru
      _
    // Predicated region
    $region54: #{tpu_custom_call.1} parent=1 // pred_check
      _
    $region55: #{tpu_custom_call.1} parent=1 // pred_check_branch
      %95 = sbr.rel (0) target = $region57
    $region56: #{tpu_custom_call.1} parent=1 // pred_region
      %96 = dma.done [#allocation9], 2048
    $region57: #{tpu_custom_call.1} parent=1 // pred_fallthru
      _
    %v98 = vld [vmem:[#allocation5] sm:$0xf]
    %v99 = vld [vmem:[#allocation2] sm:$0xff]
    %v100 = vld [vmem:[#allocation7] sm:$0xff]
    %v101 = vld [vmem:[#allocation7 + $0x8] sm:$0xff]
    %v102 = vld [vmem:[#allocation7 + $0x10] sm:$0xff]
    %v103 = vld [vmem:[#allocation7 + $0x18] sm:$0xff]
    %v104 = vld [vmem:[#allocation7 + $0x20] sm:$0xff]
    %v105 = vld [vmem:[#allocation7 + $0x28] sm:$0xff]
    %v106 = vld [vmem:[#allocation7 + $0x30] sm:$0xff]
    %v107 = vld [vmem:[#allocation7 + $0x38] sm:$0xff]
    %v108 = vld [vmem:[#allocation7 + $0x40] sm:$0xff]
    %v109 = vld [vmem:[#allocation7 + $0x48] sm:$0xff]
    %v110 = vld [vmem:[#allocation7 + $0x50] sm:$0xff]
    %v111 = vld [vmem:[#allocation7 + $0x58] sm:$0xff]
    %v112 = vld [vmem:[#allocation7 + $0x60] sm:$0xff]
    %v113 = vld [vmem:[#allocation7 + $0x68] sm:$0xff]
    %v114 = vld [vmem:[#allocation7 + $0x70] sm:$0xff]
    %v115 = vld [vmem:[#allocation7 + $0x78] sm:$0xff]
    %v116 = vld [vmem:[%s3] sm:$0x1]
    %v118 = vlaneseq
    %v119 = vshrl.u32 %v118, 7
    %v120 = vsub.s32 0, %v119
    %v121 = vrot.slane %v116, %v120
    %123 = vmatprep.subr.mxu0 0.0
    %124 = vmatpush1.msra.mxu0 %v115
    %125 = vmatprep.subr.mxu0 0.0
    %126 = vmatpush1.msra.mxu0 %v114
    %127 = vmatprep.subr.mxu0 0.0
    %128 = vmatpush1.msra.mxu0 %v113
    %129 = vmatprep.subr.mxu0 0.0
    %130 = vmatpush1.msra.mxu0 %v112
    %131 = vmatprep.subr.mxu0 0.0
    %132 = vmatpush1.msra.mxu0 %v111
    %133 = vmatprep.subr.mxu0 0.0
    %134 = vmatpush1.msra.mxu0 %v110
    %135 = vmatprep.subr.mxu0 0.0
    %136 = vmatpush1.msra.mxu0 %v109
    %137 = vmatprep.subr.mxu0 0.0
    %138 = vmatpush1.msra.mxu0 %v108
    %139 = vmatprep.subr.mxu0 0.0
    %140 = vmatpush1.msra.mxu0 %v107
    %141 = vmatprep.subr.mxu0 0.0
    %142 = vmatpush1.msra.mxu0 %v106
    %143 = vmatprep.subr.mxu0 0.0
    %144 = vmatpush1.msra.mxu0 %v105
    %145 = vmatprep.subr.mxu0 0.0
    %146 = vmatpush1.msra.mxu0 %v104
    %147 = vmatprep.subr.mxu0 0.0
    %148 = vmatpush1.msra.mxu0 %v103
    %149 = vmatprep.subr.mxu0 0.0
    %150 = vmatpush1.msra.mxu0 %v102
    %151 = vmatprep.subr.mxu0 0.0
    %152 = vmatpush1.msra.mxu0 %v101
    %153 = vmatprep.subr.mxu0 0.0
    %154 = vmatpush1.msra.mxu0 %v100
    %155 = vmatprep.subr.mxu0 0.0
    %156 = vmatpush2.msra.mxu0 0.0
    %157 = vmatprep.subr.mxu0 0.0
    %158 = vmatpush2.msra.mxu0 0.0
    %159 = vmatprep.subr.mxu0 0.0
    %160 = vmatpush2.msra.mxu0 0.0
    %161 = vmatprep.subr.mxu0 0.0
    %162 = vmatpush2.msra.mxu0 0.0
    %163 = vmatprep.subr.mxu0 0.0
    %164 = vmatpush2.msra.mxu0 0.0
    %165 = vmatprep.subr.mxu0 0.0
    %166 = vmatpush2.msra.mxu0 0.0
    %167 = vmatprep.subr.mxu0 0.0
    %168 = vmatpush2.msra.mxu0 0.0
    %169 = vmatprep.subr.mxu0 0.0
    %170 = vmatpush2.msra.mxu0 0.0
    %171 = vmatprep.subr.mxu0 0.0
    %172 = vmatpush2.msra.mxu0 0.0
    %173 = vmatprep.subr.mxu0 0.0
    %174 = vmatpush2.msra.mxu0 0.0
    %175 = vmatprep.subr.mxu0 0.0
    %176 = vmatpush2.msra.mxu0 0.0
    %177 = vmatprep.subr.mxu0 0.0
    %178 = vmatpush2.msra.mxu0 0.0
    %179 = vmatprep.subr.mxu0 0.0
    %180 = vmatpush2.msra.mxu0 0.0
    %181 = vmatprep.subr.mxu0 0.0
    %182 = vmatpush2.msra.mxu0 0.0
    %183 = vmatprep.subr.mxu0 0.0
    %184 = vmatpush2.msra.mxu0 0.0
    %185 = vmatprep.subr.mxu0 0.0
    %186 = vmatpush2.msra.mxu0 0.0
    %187 = vmatprep.mubr.f32.mxu0 0.0
    %188 = vmatmul.mubr.f32.gmra.mxu0 %v99
    %v189 = vpop.f32.mrf.mxu0
    %v190 = vadd.f32 %v121, %v189
    %v191 = vpop.f32.mrf.mxu0
    %192 = vdwg.mxu0
    %v193 = vmax.f32 %v190, 0.0
    %v194 = vsub.f32 0.0, %v193
    %v195 = vmul.f32 %v194, 1.442695
    %v196 = vpow.pop %v195
    %v197 = vmul.f32 %v193, %v196
    %v198 = vmul.f32 %v197, %v196
    %v199 = vpack.c.bf16 %v197, %v197
    %v200 = vpack.c.bf16 %v198, %v198
    %vm201 = vcmask 64512
    %v203 = vsel %vm201, %v98, 0
    %vm205 = vcmask 1043456
    %v207 = vsel %vm205, %v199, 0
    %v210 = vsel %vm205, %v200, 0
    %212 = vmatprep.subr.bf16.mxu0 0
    %213 = vmatpush1.bf16.msra.mxu0 0
    %214 = vmatprep.subr.bf16.mxu0 0
    %215 = vmatpush1.bf16.msra.mxu0 0
    %216 = vmatprep.subr.bf16.mxu0 0
    %217 = vmatpush1.bf16.msra.mxu0 0
    %218 = vmatprep.subr.bf16.mxu0 0
    %219 = vmatpush1.bf16.msra.mxu0 0
    %220 = vmatprep.subr.bf16.mxu0 0
    %221 = vmatpush1.bf16.msra.mxu0 0
    %222 = vmatprep.subr.bf16.mxu0 0
    %223 = vmatpush1.bf16.msra.mxu0 0
    %224 = vmatprep.subr.bf16.mxu0 0
    %225 = vmatpush1.bf16.msra.mxu0 0
    %226 = vmatprep.subr.bf16.mxu0 %v210
    %227 = vmatpush1.bf16.msra.mxu0 %v207
    %228 = vmatprep.subr.bf16.mxu0 0
    %229 = vmatpush2.bf16.msra.mxu0 0
    %230 = vmatprep.subr.bf16.mxu0 0
    %231 = vmatpush2.bf16.msra.mxu0 0
    %232 = vmatprep.subr.bf16.mxu0 0
    %233 = vmatpush2.bf16.msra.mxu0 0
    %234 = vmatprep.subr.bf16.mxu0 0
    %235 = vmatpush2.bf16.msra.mxu0 0
    %236 = vmatprep.subr.bf16.mxu0 0
    %237 = vmatpush2.bf16.msra.mxu0 0
    %238 = vmatprep.subr.bf16.mxu0 0
    %239 = vmatpush2.bf16.msra.mxu0 0
    %240 = vmatprep.subr.bf16.mxu0 0
    %241 = vmatpush2.bf16.msra.mxu0 0
    %242 = vmatprep.subr.bf16.mxu0 0
    %243 = vmatpush2.bf16.msra.mxu0 0
    %244 = vmatprep.mubr.bf16.mxu0 0
    %245 = vmatmul.mubr.bf16.gmra.mxu0 %v203
    %v246 = vpop.f32.mrf.mxu0
    %v247 = vadd.f32 0.0, %v246
    %v248 = vpop.f32.mrf.mxu0
    %v249 = vadd.f32 0.0, %v248
    %v250 = vpop.f32.mrf.mxu0
    %v251 = vpop.f32.mrf.mxu0
    %252 = vdwg.mxu0
    %v253 = vmax.f32 %v247, 0.0
    %v254 = vmax.f32 %v249, 0.0
    %v255 = vld [vmem:[#allocation8] sm:$0xff]
    %v256 = vld [vmem:[#allocation8 + $0x8] sm:$0xff]
    %v257 = vld [vmem:[#allocation8 + $0x10] sm:$0xff]
    %v258 = vld [vmem:[#allocation8 + $0x18] sm:$0xff]
    %v259 = vld [vmem:[#allocation8 + $0x20] sm:$0xff]
    %v260 = vld [vmem:[#allocation8 + $0x28] sm:$0xff]
    %v261 = vld [vmem:[#allocation8 + $0x30] sm:$0xff]
    %v262 = vld [vmem:[#allocation8 + $0x38] sm:$0xff]
    %v263 = vld [vmem:[#allocation8 + $0x40] sm:$0xff]
    %v264 = vld [vmem:[#allocation8 + $0x48] sm:$0xff]
    %v265 = vld [vmem:[#allocation8 + $0x50] sm:$0xff]
    %v266 = vld [vmem:[#allocation8 + $0x58] sm:$0xff]
    %v267 = vld [vmem:[#allocation8 + $0x60] sm:$0xff]
    %v268 = vld [vmem:[#allocation8 + $0x68] sm:$0xff]
    %v269 = vld [vmem:[#allocation8 + $0x70] sm:$0xff]
    %v270 = vld [vmem:[#allocation8 + $0x78] sm:$0xff]
    %v271 = vld [vmem:[%s5] sm:$0x1]
    %v273 = vlaneseq
    %v274 = vshrl.u32 %v273, 7
    %v275 = vsub.s32 0, %v274
    %v276 = vrot.slane %v271, %v275
    %278 = vmatprep.subr.mxu0 0.0
    %279 = vmatpush1.msra.mxu0 %v270
    %280 = vmatprep.subr.mxu0 0.0
    %281 = vmatpush1.msra.mxu0 %v269
    %282 = vmatprep.subr.mxu0 0.0
    %283 = vmatpush1.msra.mxu0 %v268
    %284 = vmatprep.subr.mxu0 0.0
    %285 = vmatpush1.msra.mxu0 %v267
    %286 = vmatprep.subr.mxu0 0.0
    %287 = vmatpush1.msra.mxu0 %v266
    %288 = vmatprep.subr.mxu0 0.0
    %289 = vmatpush1.msra.mxu0 %v265
    %290 = vmatprep.subr.mxu0 0.0
    %291 = vmatpush1.msra.mxu0 %v264
    %292 = vmatprep.subr.mxu0 0.0
    %293 = vmatpush1.msra.mxu0 %v263
    %294 = vmatprep.subr.mxu0 0.0
    %295 = vmatpush1.msra.mxu0 %v262
    %296 = vmatprep.subr.mxu0 0.0
    %297 = vmatpush1.msra.mxu0 %v261
    %298 = vmatprep.subr.mxu0 0.0
    %299 = vmatpush1.msra.mxu0 %v260
    %300 = vmatprep.subr.mxu0 0.0
    %301 = vmatpush1.msra.mxu0 %v259
    %302 = vmatprep.subr.mxu0 0.0
    %303 = vmatpush1.msra.mxu0 %v258
    %304 = vmatprep.subr.mxu0 0.0
    %305 = vmatpush1.msra.mxu0 %v257
    %306 = vmatprep.subr.mxu0 0.0
    %307 = vmatpush1.msra.mxu0 %v256
    %308 = vmatprep.subr.mxu0 0.0
    %309 = vmatpush1.msra.mxu0 %v255
    %310 = vmatprep.subr.mxu0 0.0
    %311 = vmatpush2.msra.mxu0 0.0
    %312 = vmatprep.subr.mxu0 0.0
    %313 = vmatpush2.msra.mxu0 0.0
    %314 = vmatprep.subr.mxu0 0.0
    %315 = vmatpush2.msra.mxu0 0.0
    %316 = vmatprep.subr.mxu0 0.0
    %317 = vmatpush2.msra.mxu0 0.0
    %318 = vmatprep.subr.mxu0 0.0
    %319 = vmatpush2.msra.mxu0 0.0
    %320 = vmatprep.subr.mxu0 0.0
    %321 = vmatpush2.msra.mxu0 0.0
    %322 = vmatprep.subr.mxu0 0.0
    %323 = vmatpush2.msra.mxu0 0.0
    %324 = vmatprep.subr.mxu0 0.0
    %325 = vmatpush2.msra.mxu0 0.0
    %326 = vmatprep.subr.mxu0 0.0
    %327 = vmatpush2.msra.mxu0 0.0
    %328 = vmatprep.subr.mxu0 0.0
    %329 = vmatpush2.msra.mxu0 0.0
    %330 = vmatprep.subr.mxu0 0.0
    %331 = vmatpush2.msra.mxu0 0.0
    %332 = vmatprep.subr.mxu0 0.0
    %333 = vmatpush2.msra.mxu0 0.0
    %334 = vmatprep.subr.mxu0 0.0
    %335 = vmatpush2.msra.mxu0 0.0
    %336 = vmatprep.subr.mxu0 0.0
    %337 = vmatpush2.msra.mxu0 0.0
    %338 = vmatprep.subr.mxu0 0.0
    %339 = vmatpush2.msra.mxu0 0.0
    %340 = vmatprep.subr.mxu0 0.0
    %341 = vmatpush2.msra.mxu0 0.0
    %342 = vmatprep.mubr.f32.mxu0 0.0
    %343 = vmatmul.mubr.f32.gmra.mxu0 %v253
    %v344 = vpop.f32.mrf.mxu0
    %v345 = vadd.f32 %v276, %v344
    %v346 = vpop.f32.mrf.mxu0
    %347 = vdwg.mxu0
    %v348 = vld [vmem:[#allocation10] sm:$0xff]
    %v349 = vld [vmem:[#allocation10 + $0x8] sm:$0xff]
    %v350 = vld [vmem:[#allocation10 + $0x10] sm:$0xff]
    %v351 = vld [vmem:[#allocation10 + $0x18] sm:$0xff]
    %v352 = vld [vmem:[#allocation10 + $0x20] sm:$0xff]
    %v353 = vld [vmem:[#allocation10 + $0x28] sm:$0xff]
    %v354 = vld [vmem:[#allocation10 + $0x30] sm:$0xff]
    %v355 = vld [vmem:[#allocation10 + $0x38] sm:$0xff]
    %v356 = vld [vmem:[#allocation10 + $0x40] sm:$0xff]
    %v357 = vld [vmem:[#allocation10 + $0x48] sm:$0xff]
    %v358 = vld [vmem:[#allocation10 + $0x50] sm:$0xff]
    %v359 = vld [vmem:[#allocation10 + $0x58] sm:$0xff]
    %v360 = vld [vmem:[#allocation10 + $0x60] sm:$0xff]
    %v361 = vld [vmem:[#allocation10 + $0x68] sm:$0xff]
    %v362 = vld [vmem:[#allocation10 + $0x70] sm:$0xff]
    %v363 = vld [vmem:[#allocation10 + $0x78] sm:$0xff]
    %v364 = vld [vmem:[%s7] sm:$0x1]
    %v366 = vlaneseq
    %v367 = vshrl.u32 %v366, 7
    %v368 = vsub.s32 0, %v367
    %v369 = vrot.slane %v364, %v368
    %371 = vmatprep.subr.mxu0 0.0
    %372 = vmatpush1.msra.mxu0 %v363
    %373 = vmatprep.subr.mxu0 0.0
    %374 = vmatpush1.msra.mxu0 %v362
    %375 = vmatprep.subr.mxu0 0.0
    %376 = vmatpush1.msra.mxu0 %v361
    %377 = vmatprep.subr.mxu0 0.0
    %378 = vmatpush1.msra.mxu0 %v360
    %379 = vmatprep.subr.mxu0 0.0
    %380 = vmatpush1.msra.mxu0 %v359
    %381 = vmatprep.subr.mxu0 0.0
    %382 = vmatpush1.msra.mxu0 %v358
    %383 = vmatprep.subr.mxu0 0.0
    %384 = vmatpush1.msra.mxu0 %v357
    %385 = vmatprep.subr.mxu0 0.0
    %386 = vmatpush1.msra.mxu0 %v356
    %387 = vmatprep.subr.mxu0 0.0
    %388 = vmatpush1.msra.mxu0 %v355
    %389 = vmatprep.subr.mxu0 0.0
    %390 = vmatpush1.msra.mxu0 %v354
    %391 = vmatprep.subr.mxu0 0.0
    %392 = vmatpush1.msra.mxu0 %v353
    %393 = vmatprep.subr.mxu0 0.0
    %394 = vmatpush1.msra.mxu0 %v352
    %395 = vmatprep.subr.mxu0 0.0
    %396 = vmatpush1.msra.mxu0 %v351
    %397 = vmatprep.subr.mxu0 0.0
    %398 = vmatpush1.msra.mxu0 %v350
    %399 = vmatprep.subr.mxu0 0.0
    %400 = vmatpush1.msra.mxu0 %v349
    %401 = vmatprep.subr.mxu0 0.0
    %402 = vmatpush1.msra.mxu0 %v348
    %403 = vmatprep.subr.mxu0 0.0
    %404 = vmatpush2.msra.mxu0 0.0
    %405 = vmatprep.subr.mxu0 0.0
    %406 = vmatpush2.msra.mxu0 0.0
    %407 = vmatprep.subr.mxu0 0.0
    %408 = vmatpush2.msra.mxu0 0.0
    %409 = vmatprep.subr.mxu0 0.0
    %410 = vmatpush2.msra.mxu0 0.0
    %411 = vmatprep.subr.mxu0 0.0
    %412 = vmatpush2.msra.mxu0 0.0
    %413 = vmatprep.subr.mxu0 0.0
    %414 = vmatpush2.msra.mxu0 0.0
    %415 = vmatprep.subr.mxu0 0.0
    %416 = vmatpush2.msra.mxu0 0.0
    %417 = vmatprep.subr.mxu0 0.0
    %418 = vmatpush2.msra.mxu0 0.0
    %419 = vmatprep.subr.mxu0 0.0
    %420 = vmatpush2.msra.mxu0 0.0
    %421 = vmatprep.subr.mxu0 0.0
    %422 = vmatpush2.msra.mxu0 0.0
    %423 = vmatprep.subr.mxu0 0.0
    %424 = vmatpush2.msra.mxu0 0.0
    %425 = vmatprep.subr.mxu0 0.0
    %426 = vmatpush2.msra.mxu0 0.0
    %427 = vmatprep.subr.mxu0 0.0
    %428 = vmatpush2.msra.mxu0 0.0
    %429 = vmatprep.subr.mxu0 0.0
    %430 = vmatpush2.msra.mxu0 0.0
    %431 = vmatprep.subr.mxu0 0.0
    %432 = vmatpush2.msra.mxu0 0.0
    %433 = vmatprep.subr.mxu0 0.0
    %434 = vmatpush2.msra.mxu0 0.0
    %435 = vmatprep.mubr.f32.mxu0 0.0
    %436 = vmatmul.mubr.f32.gmra.mxu0 %v254
    %v437 = vpop.f32.mrf.mxu0
    %v438 = vadd.f32 %v369, %v437
    %v439 = vpop.f32.mrf.mxu0
    %440 = vdwg.mxu0
    %v441 = vmax.f32 %v345, 0.0
    %v442 = vmax.f32 %v438, 0.0
    %v443 = vsub.f32 0.0, %v442
    %v444 = vmul.f32 %v443, 1.442695
    %v445 = vpow.pop %v444
    %v446 = vmul.f32 %v441, %v445
    %v447 = vmul.f32 %v442, %v445
    %v448 = vmul.f32 %v447, %v445
    %v449 = vpack.c.bf16 %v446, %v446
    %v450 = vpack.c.bf16 %v448, %v448
    %v452 = vsel %vm205, %v449, 0
    %v455 = vsel %vm205, %v450, 0
    %457 = vmatprep.subr.bf16.mxu0 0
    %458 = vmatpush1.bf16.msra.mxu0 0
    %459 = vmatprep.subr.bf16.mxu0 0
    %460 = vmatpush1.bf16.msra.mxu0 0
    %461 = vmatprep.subr.bf16.mxu0 0
    %462 = vmatpush1.bf16.msra.mxu0 0
    %463 = vmatprep.subr.bf16.mxu0 0
    %464 = vmatpush1.bf16.msra.mxu0 0
    %465 = vmatprep.subr.bf16.mxu0 0
    %466 = vmatpush1.bf16.msra.mxu0 0
    %467 = vmatprep.subr.bf16.mxu0 0
    %468 = vmatpush1.bf16.msra.mxu0 0
    %469 = vmatprep.subr.bf16.mxu0 0
    %470 = vmatpush1.bf16.msra.mxu0 0
    %471 = vmatprep.subr.bf16.mxu0 %v455
    %472 = vmatpush1.bf16.msra.mxu0 %v452
    %473 = vmatprep.subr.bf16.mxu0 0
    %474 = vmatpush2.bf16.msra.mxu0 0
    %475 = vmatprep.subr.bf16.mxu0 0
    %476 = vmatpush2.bf16.msra.mxu0 0
    %477 = vmatprep.subr.bf16.mxu0 0
    %478 = vmatpush2.bf16.msra.mxu0 0
    %479 = vmatprep.subr.bf16.mxu0 0
    %480 = vmatpush2.bf16.msra.mxu0 0
    %481 = vmatprep.subr.bf16.mxu0 0
    %482 = vmatpush2.bf16.msra.mxu0 0
    %483 = vmatprep.subr.bf16.mxu0 0
    %484 = vmatpush2.bf16.msra.mxu0 0
    %485 = vmatprep.subr.bf16.mxu0 0
    %486 = vmatpush2.bf16.msra.mxu0 0
    %487 = vmatprep.subr.bf16.mxu0 0
    %488 = vmatpush2.bf16.msra.mxu0 0
    %489 = vmatprep.mubr.bf16.mxu0 0
    %490 = vmatmul.mubr.bf16.gmra.mxu0 %v203
    %v491 = vpop.f32.mrf.mxu0
    %v492 = vadd.f32 0.0, %v491
    %v493 = vpop.f32.mrf.mxu0
    %v494 = vadd.f32 0.0, %v493
    %v495 = vpop.f32.mrf.mxu0
    %v496 = vpop.f32.mrf.mxu0
    %497 = vdwg.mxu0
    %v498 = vmax.f32 %v492, 0.0
    %v499 = vmax.f32 %v494, 0.0
    %v500 = vld [vmem:[%s8] sm:$0xff]
    %v501 = vrsqrt.pop %v499
    %v502 = vmul.f32 %v499, %v501
    %vm503 = vcmp.eq.f32.partialorder %v499, inf
    %v504 = vsel %vm503, %v499, %v502
    %vm505 = vcmp.eq.f32.partialorder %v499, 0.0
    %v506 = vand.u32 %v499, 2147483648
    %v507 = vsel %vm505, %v506, %v504
    %v508 = vmul.f32 %v500, %v507
    %v509 = vadd.f32 %v498, %v508
    %510 = vst [vmem:[#allocation11] sm:$0xff] %v509
    // Predicated region
    $region58: #{tpu_custom_call.1} parent=1 // pred_check
      _
    $region59: #{tpu_custom_call.1} parent=1 // pred_check_branch
      %512 = sbr.rel (0) target = $region61
    $region60: #{tpu_custom_call.1} parent=1 // pred_region
      %s514 = ssub.s32 128, 128
      %515 = vsyncadd [#allocation4], %s514
      %s517 = sshll.u32 [#allocation11], 4
      %s518 = int_to_ptr.vmem [resolvable:$true] %s517
      %520 = dma.vmem_to_hbm [thread:$0]  %s518, 128, %s9, [#allocation4]
    $region61: #{tpu_custom_call.1} parent=1 // pred_fallthru
      _
    // Predicated region
    $region62: #{tpu_custom_call.1} parent=1 // pred_check
      _
    $region63: #{tpu_custom_call.1} parent=1 // pred_check_branch
      %522 = sbr.rel (0) target = $region65
    $region64: #{tpu_custom_call.1} parent=1 // pred_region
      %523 = dma.done [#allocation4], 128
    $region65: #{tpu_custom_call.1} parent=1 // pred_fallthru
      _
    %524 = vsyncpa [#allocation3], 1
    %525 = vsyncpa [#allocation6], 1
    %526 = vsyncpa [#allocation9], 1
    %527 = vsyncpa [#allocation4], 1

</llo_original>
